<compile_context>
chip_gen: v6e
topology: v6e:2x2x1
jax: 0.10.0
libtpu: 0.0.40
codegen_flags: <defaults>
</compile_context>

<pallas_src>
import functools

import jax
import jax.numpy as jnp
from jax.experimental import pallas as pl
from jax.experimental.pallas import tpu as pltpu


def _lsce_kernel(tgt_ref, scores_ref, nll_out, smooth_out,
                 acc_nll, acc_smooth, *,
                 vocab, n_rows, row_tile, blocks_per_split, ignore_index):
    s = pl.program_id(0)          # parallel split axis (megacore on v7x)
    i = pl.program_id(1)          # arbitrary reduction axis over row blocks

    @pl.when(i == 0)
    def _():
        acc_nll[...] = jnp.zeros_like(acc_nll)
        acc_smooth[...] = jnp.zeros_like(acc_smooth)

    x = scores_ref[...].astype(jnp.float32)                 # (TR, V), math in f32
    tgt = tgt_ref[...]                                      # (TR, 1) int32

    # log-sum-exp; nll/smooth computed directly from x and lse (no lprobs tensor).
    m = jnp.max(x, axis=-1, keepdims=True)                  # (TR, 1)
    lse = jnp.log(jnp.sum(jnp.exp(x - m), axis=-1, keepdims=True)) + m

    col = jax.lax.broadcasted_iota(jnp.int32, x.shape, 1)
    x_tgt = jnp.sum(jnp.where(col == tgt, x, 0.0), axis=-1, keepdims=True)
    sum_x = jnp.sum(x, axis=-1, keepdims=True)

    nll_rows = lse - x_tgt                                  # -lprobs.gather(target)
    smooth_rows = jnp.float32(vocab) * lse - sum_x          # -lprobs.sum(-1)

    # Mask padded rows (global row >= n_rows) and ignore_index rows.
    row = jax.lax.broadcasted_iota(jnp.int32, (row_tile, 1), 0)
    global_row = (s * blocks_per_split + i) * row_tile + row
    valid = global_row < n_rows
    if ignore_index is not None:
        valid = jnp.logical_and(valid, tgt != ignore_index)
    nll_rows = jnp.where(valid, nll_rows, 0.0)
    smooth_rows = jnp.where(valid, smooth_rows, 0.0)

    # Per-row partial accumulation; only one sublane reduce at the very end.
    acc_nll[...] += nll_rows
    acc_smooth[...] += smooth_rows

    @pl.when(i == pl.num_programs(1) - 1)
    def _():
        tot_nll = jnp.sum(acc_nll[...], axis=0, keepdims=True)       # (1, 1)
        tot_sm = jnp.sum(acc_smooth[...], axis=0, keepdims=True)
        nll_out[...] = jnp.broadcast_to(tot_nll.reshape(1, 1, 1), nll_out.shape)
        smooth_out[...] = jnp.broadcast_to(tot_sm.reshape(1, 1, 1), smooth_out.shape)


def _round_up(x, m):
    return (x + m - 1) // m * m


def label_smoothed_cross_entropy(scores, target, *, label_smoothing,
                                 ignore_index=None, row_tile=None, n_split=2):
    """Returns (loss, nll_loss) matching the PyTorch module (reduce=True)."""
    assert 0.0 < label_smoothing <= 1.0
    V = scores.shape[-1]
    scores2d = scores.reshape(-1, V)            # keep input dtype (bf16 OK: halves HBM)
    tgt2d = target.reshape(-1, 1).astype(jnp.int32)
    N = scores2d.shape[0]
    itemsize = scores2d.dtype.itemsize

    # Largest row tile whose double-buffered scores slab stays ~<=16 MiB (safe for
    # v7x's 64 MiB VMEM, and big enough to hit ~85% of HBM roofline on v5e/v6e),
    # without over-padding tiny problems. Multiple of 16 keeps bf16 tiling legal.
    if row_tile is None:
        by_vmem = max(16, ((8 * 1024 * 1024) // (V * itemsize)) // 16 * 16)
        by_need = _round_up(max(1, -(-N // n_split)), 16)
        row_tile = max(16, min(1024, by_vmem, by_need))

    n_pad = _round_up(N, n_split * row_tile)
    if n_pad != N:
        scores2d = jnp.pad(scores2d, ((0, n_pad - N), (0, 0)))
        tgt2d = jnp.pad(tgt2d, ((0, n_pad - N), (0, 0)))
    bps = n_pad // row_tile // n_split          # row blocks per split

    kernel = functools.partial(
        _lsce_kernel, vocab=V, n_rows=N, row_tile=row_tile,
        blocks_per_split=bps, ignore_index=ignore_index)

    scores_buf = row_tile * V * itemsize
    vmem_limit = int(min(max(2 * scores_buf + (8 << 20), 32 << 20), 56 << 20))

    cost = pl.CostEstimate(
        flops=5 * N * V,
        transcendentals=N * V,
        bytes_accessed=N * V * itemsize + N * 4)

    nll_p, smooth_p = pl.pallas_call(
        kernel,
        out_shape=(jax.ShapeDtypeStruct((n_split, 8, 128), jnp.float32),
                   jax.ShapeDtypeStruct((n_split, 8, 128), jnp.float32)),
        grid_spec=pltpu.PrefetchScalarGridSpec(
            num_scalar_prefetch=0,
            grid=(n_split, bps),
            in_specs=[pl.BlockSpec((row_tile, 1), lambda s, i: (s * bps + i, 0)),
                      pl.BlockSpec((row_tile, V), lambda s, i: (s * bps + i, 0))],
            out_specs=[pl.BlockSpec((1, 8, 128), lambda s, i: (s, 0, 0)),
                       pl.BlockSpec((1, 8, 128), lambda s, i: (s, 0, 0))],
            scratch_shapes=[pltpu.VMEM((row_tile, 1), jnp.float32),
                            pltpu.VMEM((row_tile, 1), jnp.float32)]),
        compiler_params=pltpu.CompilerParams(
            dimension_semantics=("parallel", "arbitrary"),
            vmem_limit_bytes=vmem_limit),
        cost_estimate=cost,
    )(tgt2d, scores2d)

    nll_sum = jnp.sum(nll_p[:, 0, 0])
    smooth_sum = jnp.sum(smooth_p[:, 0, 0])
    eps = float(label_smoothing)
    loss = (1.0 - eps) * nll_sum + (eps / V) * smooth_sum
    return loss, nll_sum


def _reference(scores, target, eps, ignore_index):
    lprobs = jax.nn.log_softmax(scores.astype(jnp.float32), axis=-1)
    tgt = target[..., None]
    nll = -jnp.take_along_axis(lprobs, tgt, axis=-1)
    smooth = -jnp.sum(lprobs, axis=-1, keepdims=True)
    if ignore_index is not None:
        pad = tgt == ignore_index
        nll = jnp.where(pad, 0.0, nll)
        smooth = jnp.where(pad, 0.0, smooth)
    nll_sum = nll.sum()
    smooth_sum = smooth.sum()
    loss = (1.0 - eps) * nll_sum + (eps / scores.shape[-1]) * smooth_sum
    return loss, nll_sum


if __name__ == "__main__":
    # LabelSmoothedCrossEntropy has no learnable parameters; only eps / ignore_index.
    eps = 0.1
    ignore_index = 3

    batch, seq, vocab = 2, 8, 512
    key = jax.random.PRNGKey(0)
    k_scores, k_tgt = jax.random.split(key)
    scores = jax.random.normal(k_scores, (batch, seq, vocab), dtype=jnp.float32)
    target = jax.random.randint(k_tgt, (batch, seq), 0, vocab, dtype=jnp.int32)
    # force a few padding positions to exercise the ignore_index mask
    target = target.at[0, :2].set(ignore_index)

    # with ignore_index (also exercises the N-padding mask, since N=16 -> padded to 32)
    loss, nll = label_smoothed_cross_entropy(
        scores, target, label_smoothing=eps, ignore_index=ignore_index)
    jax.block_until_ready((loss, nll))
    ref_loss, ref_nll = _reference(scores, target, eps, ignore_index)
    assert jnp.allclose(loss, ref_loss, rtol=1e-4, atol=1e-4), (loss, ref_loss)
    assert jnp.allclose(nll, ref_nll, rtol=1e-4, atol=1e-4), (nll, ref_nll)

    # without ignore_index (padding-only mask path)
    loss2, nll2 = label_smoothed_cross_entropy(
        scores, target, label_smoothing=eps, ignore_index=None)
    jax.block_until_ready((loss2, nll2))
    ref_loss2, ref_nll2 = _reference(scores, target, eps, None)
    assert jnp.allclose(loss2, ref_loss2, rtol=1e-4, atol=1e-4), (loss2, ref_loss2)
    assert jnp.allclose(nll2, ref_nll2, rtol=1e-4, atol=1e-4), (nll2, ref_nll2)

    print("KERNEL_OK")
</pallas_src>

<mosaic_0001>
module attributes {stable_mosaic.version = 11 : i64} {
  func.func @_lsce_kernel(%arg0: i32, %arg1: i32, %arg2: memref<16x1xi32, #tpu.memory_space<vmem>>, %arg3: memref<16x512xf32, #tpu.memory_space<vmem>>, %arg4: memref<1x8x128xf32, #tpu.memory_space<vmem>>, %arg5: memref<1x8x128xf32, #tpu.memory_space<vmem>>, %arg6: memref<16x1xf32, #tpu.memory_space<vmem>>, %arg7: memref<16x1xf32, #tpu.memory_space<vmem>>) attributes {dimension_semantics = [#tpu.dimension_semantics<parallel>, #tpu.dimension_semantics<arbitrary>], iteration_bounds = array<i64: 2, 1>, scalar_prefetch = 0 : i64, scratch_operands = 2 : i64, tpu.core_type = #tpu.core_type<tc>, window_params = [{transform_indices = @transform_0, window_bounds = array<i64: 16, 1>}, {transform_indices = @transform_1, window_bounds = array<i64: 16, 512>}, {transform_indices = @transform_2, window_bounds = array<i64: 1, 8, 128>}, {transform_indices = @transform_3, window_bounds = array<i64: 1, 8, 128>}]} {
    %c0_i32 = arith.constant 0 : i32
    %0 = arith.cmpi eq, %arg1, %c0_i32 : i32
    %1 = arith.extui %0 : i1 to i32
    %c0_i32_0 = arith.constant 0 : i32
    %2 = arith.cmpi ne, %1, %c0_i32_0 : i32
    scf.if %2 {
      %cst_22 = arith.constant 0.000000e+00 : f32
      %51 = vector.broadcast %cst_22 : f32 to vector<16x1xf32>
      %c0_23 = arith.constant 0 : index
      %c0_24 = arith.constant 0 : index
      %52 = vector.load %arg6[%c0_23, %c0_24] : memref<16x1xf32, #tpu.memory_space<vmem>>, vector<16x1xf32>
      tpu.vector_store %arg6[%c0_23, %c0_24], %51 {strides = array<i32>} : memref<16x1xf32, #tpu.memory_space<vmem>>, vector<16x1xf32>,
      %cst_25 = arith.constant 0.000000e+00 : f32
      %53 = vector.broadcast %cst_25 : f32 to vector<16x1xf32>
      %c0_26 = arith.constant 0 : index
      %c0_27 = arith.constant 0 : index
      %54 = vector.load %arg7[%c0_26, %c0_27] : memref<16x1xf32, #tpu.memory_space<vmem>>, vector<16x1xf32>
      tpu.vector_store %arg7[%c0_26, %c0_27], %53 {strides = array<i32>} : memref<16x1xf32, #tpu.memory_space<vmem>>, vector<16x1xf32>,
    } else {
    }
    %c0 = arith.constant 0 : index
    %c0_1 = arith.constant 0 : index
    %3 = vector.load %arg3[%c0, %c0_1] : memref<16x512xf32, #tpu.memory_space<vmem>>, vector<16x512xf32>
    %c0_2 = arith.constant 0 : index
    %c0_3 = arith.constant 0 : index
    %4 = vector.load %arg2[%c0_2, %c0_3] : memref<16x1xi32, #tpu.memory_space<vmem>>, vector<16x1xi32>
    %cst = arith.constant dense<0xFF800000> : vector<16xf32>
    %5 = vector.multi_reduction <maximumf>, %3, %cst [1] : vector<16x512xf32> to vector<16xf32>
    %6 = vector.shape_cast %5 : vector<16xf32> to vector<16x1xf32>
    %7 = vector.broadcast %6 : vector<16x1xf32> to vector<16x512xf32>
    %8 = arith.subf %3, %7 : vector<16x512xf32>
    %9 = math.exp %8 : vector<16x512xf32>
    %cst_4 = arith.constant dense<0.000000e+00> : vector<16xf32>
    %10 = vector.multi_reduction <add>, %9, %cst_4 [1] : vector<16x512xf32> to vector<16xf32>
    %11 = vector.shape_cast %10 : vector<16xf32> to vector<16x1xf32>
    %12 = math.log %11 : vector<16x1xf32>
    %13 = arith.addf %12, %6 : vector<16x1xf32>
    %14 = tpu.iota {dimensions = array<i32: 1>} : vector<16x512xi32>
    %15 = vector.broadcast %4 : vector<16x1xi32> to vector<16x512xi32>
    %16 = arith.cmpi eq, %14, %15 : vector<16x512xi32>
    %cst_5 = arith.constant 0.000000e+00 : f32
    %17 = vector.broadcast %cst_5 : f32 to vector<16x512xf32>
    %18 = arith.select %16, %3, %17 : vector<16x512xi1>, vector<16x512xf32>
    %cst_6 = arith.constant dense<0.000000e+00> : vector<16xf32>
    %19 = vector.multi_reduction <add>, %18, %cst_6 [1] : vector<16x512xf32> to vector<16xf32>
    %20 = vector.shape_cast %19 : vector<16xf32> to vector<16x1xf32>
    %cst_7 = arith.constant dense<0.000000e+00> : vector<16xf32>
    %21 = vector.multi_reduction <add>, %3, %cst_7 [1] : vector<16x512xf32> to vector<16xf32>
    %22 = vector.shape_cast %21 : vector<16xf32> to vector<16x1xf32>
    %23 = arith.subf %13, %20 : vector<16x1xf32>
    %cst_8 = arith.constant 5.120000e+02 : f32
    %24 = vector.broadcast %cst_8 : f32 to vector<16x1xf32>
    %25 = arith.mulf %24, %13 : vector<16x1xf32>
    %26 = arith.subf %25, %22 : vector<16x1xf32>
    %27 = tpu.iota {dimensions = array<i32: 0>} : vector<16x1xi32>
    %c1_i32 = arith.constant 1 : i32
    %28 = arith.muli %arg0, %c1_i32 : i32
    %29 = arith.addi %28, %arg1 : i32
    %c16_i32 = arith.constant 16 : i32
    %30 = arith.muli %29, %c16_i32 : i32
    %31 = vector.broadcast %30 : i32 to vector<16x1xi32>
    %32 = arith.addi %31, %27 : vector<16x1xi32>
    %c16_i32_9 = arith.constant 16 : i32
    %33 = vector.broadcast %c16_i32_9 : i32 to vector<16x1xi32>
    %34 = arith.cmpi slt, %32, %33 : vector<16x1xi32>
    %c3_i32 = arith.constant 3 : i32
    %35 = vector.broadcast %c3_i32 : i32 to vector<16x1xi32>
    %36 = arith.cmpi ne, %4, %35 : vector<16x1xi32>
    %37 = arith.andi %34, %36 : vector<16x1xi1>
    %cst_10 = arith.constant 0.000000e+00 : f32
    %38 = vector.broadcast %cst_10 : f32 to vector<16x1xf32>
    %39 = arith.select %37, %23, %38 : vector<16x1xi1>, vector<16x1xf32>
    %cst_11 = arith.constant 0.000000e+00 : f32
    %40 = vector.broadcast %cst_11 : f32 to vector<16x1xf32>
    %41 = arith.select %37, %26, %40 : vector<16x1xi1>, vector<16x1xf32>
    %c0_12 = arith.constant 0 : index
    %c0_13 = arith.constant 0 : index
    %42 = vector.load %arg6[%c0_12, %c0_13] : memref<16x1xf32, #tpu.memory_space<vmem>>, vector<16x1xf32>
    %43 = arith.addf %42, %39 : vector<16x1xf32>
    %c0_14 = arith.constant 0 : index
    %c0_15 = arith.constant 0 : index
    %44 = vector.load %arg6[%c0_14, %c0_15] : memref<16x1xf32, #tpu.memory_space<vmem>>, vector<16x1xf32>
    tpu.vector_store %arg6[%c0_14, %c0_15], %43 {strides = array<i32>} : memref<16x1xf32, #tpu.memory_space<vmem>>, vector<16x1xf32>,
    %c0_16 = arith.constant 0 : index
    %c0_17 = arith.constant 0 : index
    %45 = vector.load %arg7[%c0_16, %c0_17] : memref<16x1xf32, #tpu.memory_space<vmem>>, vector<16x1xf32>
    %46 = arith.addf %45, %41 : vector<16x1xf32>
    %c0_18 = arith.constant 0 : index
    %c0_19 = arith.constant 0 : index
    %47 = vector.load %arg7[%c0_18, %c0_19] : memref<16x1xf32, #tpu.memory_space<vmem>>, vector<16x1xf32>
    tpu.vector_store %arg7[%c0_18, %c0_19], %46 {strides = array<i32>} : memref<16x1xf32, #tpu.memory_space<vmem>>, vector<16x1xf32>,
    %c0_i32_20 = arith.constant 0 : i32
    %48 = arith.cmpi eq, %arg1, %c0_i32_20 : i32
    %49 = arith.extui %48 : i1 to i32
    %c0_i32_21 = arith.constant 0 : i32
    %50 = arith.cmpi ne, %49, %c0_i32_21 : i32
    scf.if %50 {
      %c0_22 = arith.constant 0 : index
      %c0_23 = arith.constant 0 : index
      %51 = vector.load %arg6[%c0_22, %c0_23] : memref<16x1xf32, #tpu.memory_space<vmem>>, vector<16x1xf32>
      %cst_24 = arith.constant dense<0.000000e+00> : vector<1xf32>
      %52 = vector.multi_reduction <add>, %51, %cst_24 [0] : vector<16x1xf32> to vector<1xf32>
      %53 = vector.shape_cast %52 : vector<1xf32> to vector<1x1xf32>
      %c0_25 = arith.constant 0 : index
      %c0_26 = arith.constant 0 : index
      %54 = vector.load %arg7[%c0_25, %c0_26] : memref<16x1xf32, #tpu.memory_space<vmem>>, vector<16x1xf32>
      %cst_27 = arith.constant dense<0.000000e+00> : vector<1xf32>
      %55 = vector.multi_reduction <add>, %54, %cst_27 [0] : vector<16x1xf32> to vector<1xf32>
      %56 = vector.shape_cast %55 : vector<1xf32> to vector<1x1xf32>
      %57 = vector.shape_cast %53 : vector<1x1xf32> to vector<1x1x1xf32>
      %58 = vector.shape_cast %57 : vector<1x1x1xf32> to vector<1x1x1xf32>
      %59 = vector.broadcast %58 : vector<1x1x1xf32> to vector<1x8x128xf32>
      %c0_28 = arith.constant 0 : index
      %c0_29 = arith.constant 0 : index
      %c0_30 = arith.constant 0 : index
      %60 = vector.load %arg4[%c0_28, %c0_29, %c0_30] : memref<1x8x128xf32, #tpu.memory_space<vmem>>, vector<1x8x128xf32>
      tpu.vector_store %arg4[%c0_28, %c0_29, %c0_30], %59 {strides = array<i32>} : memref<1x8x128xf32, #tpu.memory_space<vmem>>, vector<1x8x128xf32>,
      %61 = vector.shape_cast %56 : vector<1x1xf32> to vector<1x1x1xf32>
      %62 = vector.shape_cast %61 : vector<1x1x1xf32> to vector<1x1x1xf32>
      %63 = vector.broadcast %62 : vector<1x1x1xf32> to vector<1x8x128xf32>
      %c0_31 = arith.constant 0 : index
      %c0_32 = arith.constant 0 : index
      %c0_33 = arith.constant 0 : index
      %64 = vector.load %arg5[%c0_31, %c0_32, %c0_33] : memref<1x8x128xf32, #tpu.memory_space<vmem>>, vector<1x8x128xf32>
      tpu.vector_store %arg5[%c0_31, %c0_32, %c0_33], %63 {strides = array<i32>} : memref<1x8x128xf32, #tpu.memory_space<vmem>>, vector<1x8x128xf32>,
    } else {
    }
    return
  }
  func.func @transform_0(%arg0: i32, %arg1: i32) -> (i32, i32) {
    %c1_i32 = arith.constant 1 : i32
    %0 = arith.muli %arg0, %c1_i32 : i32
    %1 = arith.addi %0, %arg1 : i32
    %c0_i32 = arith.constant 0 : i32
    %c0_i32_0 = arith.constant 0 : i32
    return %1, %c0_i32 : i32, i32
  }
  func.func @transform_1(%arg0: i32, %arg1: i32) -> (i32, i32) {
    %c1_i32 = arith.constant 1 : i32
    %0 = arith.muli %arg0, %c1_i32 : i32
    %1 = arith.addi %0, %arg1 : i32
    %c0_i32 = arith.constant 0 : i32
    %c0_i32_0 = arith.constant 0 : i32
    return %1, %c0_i32 : i32, i32
  }
  func.func @transform_2(%arg0: i32, %arg1: i32) -> (i32, i32, i32) {
    %c0_i32 = arith.constant 0 : i32
    %c0_i32_0 = arith.constant 0 : i32
    %c0_i32_1 = arith.constant 0 : i32
    return %arg0, %c0_i32, %c0_i32_0 : i32, i32, i32
  }
  func.func @transform_3(%arg0: i32, %arg1: i32) -> (i32, i32, i32) {
    %c0_i32 = arith.constant 0 : i32
    %c0_i32_0 = arith.constant 0 : i32
    %c0_i32_1 = arith.constant 0 : i32
    return %arg0, %c0_i32, %c0_i32_0 : i32, i32, i32
  }
}

</mosaic_0001>

<llo_original>
// kernel: tpu_custom_call.1
$region0: #{tpu_custom_call.1}
  #allocation0 [shape = 'u32[]', space=smem, size = 0x4, offset = 0x4, fixed_abs, tag = 'smem constant byte address 0x4 - core index']
  #allocation1 [shape = 'u32[144,128]{1,0:T(1,128)}', space=vmem, size = 0x12000, scoped, tag = 'internal scratch']
  #allocation2 [shape = 'f32[16,1]{1,0:T(8,128)}', space=vmem, size = 0x2000, scoped, tag = 'scratch operand']
  #allocation3 [shape = 'f32[16,1]{1,0:T(8,128)}', space=vmem, size = 0x2000, scoped, tag = 'scratch operand']
  %s0 = inlined_call_operand.vmem [shape: s32[32,1], index: 0, kind: input, shape index: {}]
  %s1 = inlined_call_operand.hbm [shape: f32[32,512], index: 1, kind: input, shape index: {}]
  %s2 = inlined_call_operand.hbm [shape: f32[2,8,128], index: 2, kind: output, shape index: {0}]
  %s3 = inlined_call_operand.hbm [shape: f32[2,8,128], index: 3, kind: output, shape index: {1}]
  %4 = xla_tuple %s2, %s3
  %s5 = sld [smem:[#allocation0]]
  $region61: #{tpu_custom_call.1} parent=0
    _
  %s7 = ssub.s32 1, %s5
  %s8 = scalar_select 0, %s7, %s5
  $region1: #{tpu_custom_call.1} parent=0
    #allocation4 [shape = 'u8[65536]{0}', space=vmem, size = 0x10000, scoped, tag = 'input window, operand 1']
    #allocation5 [shape = 's32[2]{0}', space=sflag, size = 0x8, scoped, tag = 'scoped memory for tpu_custom_call.1']
    #allocation6 [shape = 's32[2]{0}', space=sflag, size = 0x8, scoped, tag = 'scoped memory for tpu_custom_call.1']
    #allocation7 [shape = 'u8[8192]{0}', space=vmem, size = 0x2000, scoped, tag = 'output window, operand 0']
    #allocation8 [shape = 'u8[8192]{0}', space=vmem, size = 0x2000, scoped, tag = 'output window, operand 1']
    #allocation9 [shape = 's32[2]{0}', space=sflag, size = 0x8, scoped, tag = 'scoped memory for tpu_custom_call.1']
    %9 = vsyncpa [#allocation5], 0
    %s10 = scalar_lea.sflag [#allocation5], 1
    %11 = vsyncpa %s10, 0
    %12 = vsyncpa [#allocation6], 0
    %s13 = scalar_lea.sflag [#allocation6], 1
    %14 = vsyncpa %s13, 0
    %15 = vsyncpa [#allocation9], 0
    %s16 = scalar_lea.sflag [#allocation9], 1
    %17 = vsyncpa %s16, 0
    loop: start=0, step=1, limit=4
    $region2: #{tpu_custom_call.1} parent=1 // loop_pre_header
      _
    $region3: #{tpu_custom_call.1} parent=1 // loop_header
      %s19 = sphi 0, %s23
      %p20 = scmp.ge.s32.totalorder %s19, 4
      %s26 = sphi 0, %s38
      %s27 = sphi 0, %s34
      %s28 = sphi 0, %s26
      %s29 = sphi 0, %s27
      %s30 = sphi 0, %s28
      %s31 = sphi 0, %s29
      %s43 = sphi 0, %s45
      %s46 = sphi 0, %s43
      %s47 = sphi 0, %s46
      %s63 = sphi 0, %s47
      %s71 = sphi 0, %s73
      %s74 = sphi 0, %s71
      %s75 = sphi 0, %s74
      %s91 = sphi 0, %s75
      %s97 = sphi 0, %s99
      %s100 = sphi 0, %s97
      %s101 = sphi 0, %s100
      %s117 = sphi 0, %s101
      %s123 = sphi 0, %s125
      %s126 = sphi 0, %s123
      %s127 = sphi 0, %s126
      %s143 = sphi 0, %s127
    $region4: #{tpu_custom_call.1} parent=1 // loop_header_branch
      %22 = sbr.rel (%p20) target = $region8
    $region5: #{tpu_custom_call.1} parent=1 // loop_body
      %s24 = ssub.s32 %s19, 1
      %s25 = ssub.s32 %s19, 2
      %s32 = sadd.s32 1, %s27
      %p33 = scmp.ge.s32.totalorder %s32, 1
      %s34 = scalar_select %p33, 0, %s32
      %s35 = sadd.s32 1, %s26
      %s36 = scalar_select %p33, %s35, %s26
      %p37 = scmp.ge.s32.totalorder %s36, 2
      %s38 = scalar_select %p37, 0, %s36
      %s39 = sadd.s32 %s26, %s27
      %s40 = sadd.s32 %s38, %s34
      %s41 = ssub.s32 %s39, %s40
      %p42 = scmp.eq.s32.totalorder %s41, 0
      %s44 = sadd.s32 %s43, 1
      %s45 = scalar_select %p42, %s43, %s44
      %p48 = pneg %p42
      %p49 = scmp.eq.s32.totalorder %s19, 1
      %p50 = por %p48, %p49
      %p51 = scmp.ne.s32.totalorder %s43, %s46
      %p52 = scmp.eq.s32.totalorder %s19, 0
      %p53 = por %p51, %p52
      %p54 = scmp.ne.s32.totalorder %s43, %s46
      %p55 = scmp.eq.s32.totalorder %s24, 1
      %p56 = por %p54, %p55
      %p57 = scmp.ne.s32.totalorder %s46, %s47
      %p58 = scmp.eq.s32.totalorder %s24, 0
      %p59 = por %p57, %p58
      %p60 = scmp.ne.s32.totalorder %s46, %s47
      %p61 = scmp.eq.s32.totalorder %s25, 1
      %p62 = por %p60, %p61
      %p64 = scmp.ne.s32.totalorder %s47, %s63
      %p65 = scmp.eq.s32.totalorder %s25, 0
      %p66 = por %p64, %p65
      %s67 = sadd.s32 %s26, %s27
      %s68 = sadd.s32 %s38, %s34
      %s69 = ssub.s32 %s67, %s68
      %p70 = scmp.eq.s32.totalorder %s69, 0
      %s72 = sadd.s32 %s71, 1
      %s73 = scalar_select %p70, %s71, %s72
      %p76 = pneg %p70
      %p77 = scmp.eq.s32.totalorder %s19, 1
      %p78 = por %p76, %p77
      %p79 = scmp.ne.s32.totalorder %s71, %s74
      %p80 = scmp.eq.s32.totalorder %s19, 0
      %p81 = por %p79, %p80
      %p82 = scmp.ne.s32.totalorder %s71, %s74
      %p83 = scmp.eq.s32.totalorder %s24, 1
      %p84 = por %p82, %p83
      %p85 = scmp.ne.s32.totalorder %s74, %s75
      %p86 = scmp.eq.s32.totalorder %s24, 0
      %p87 = por %p85, %p86
      %p88 = scmp.ne.s32.totalorder %s74, %s75
      %p89 = scmp.eq.s32.totalorder %s25, 1
      %p90 = por %p88, %p89
      %p92 = scmp.ne.s32.totalorder %s75, %s91
      %p93 = scmp.eq.s32.totalorder %s25, 0
      %p94 = por %p92, %p93
      %s95 = ssub.s32 %s26, %s38
      %p96 = scmp.eq.s32.totalorder %s95, 0
      %s98 = sadd.s32 %s97, 1
      %s99 = scalar_select %p96, %s97, %s98
      %p102 = pneg %p96
      %p103 = scmp.eq.s32.totalorder %s19, 1
      %p104 = por %p102, %p103
      %p105 = scmp.ne.s32.totalorder %s97, %s100
      %p106 = scmp.eq.s32.totalorder %s19, 0
      %p107 = por %p105, %p106
      %p108 = scmp.ne.s32.totalorder %s97, %s100
      %p109 = scmp.eq.s32.totalorder %s24, 1
      %p110 = por %p108, %p109
      %p111 = scmp.ne.s32.totalorder %s100, %s101
      %p112 = scmp.eq.s32.totalorder %s24, 0
      %p113 = por %p111, %p112
      %p114 = scmp.ne.s32.totalorder %s100, %s101
      %p115 = scmp.eq.s32.totalorder %s25, 1
      %p116 = por %p114, %p115
      %p118 = scmp.ne.s32.totalorder %s101, %s117
      %p119 = scmp.eq.s32.totalorder %s25, 0
      %p120 = por %p118, %p119
      %s121 = ssub.s32 %s26, %s38
      %p122 = scmp.eq.s32.totalorder %s121, 0
      %s124 = sadd.s32 %s123, 1
      %s125 = scalar_select %p122, %s123, %s124
      %p128 = pneg %p122
      %p129 = scmp.eq.s32.totalorder %s19, 1
      %p130 = por %p128, %p129
      %p131 = scmp.ne.s32.totalorder %s123, %s126
      %p132 = scmp.eq.s32.totalorder %s19, 0
      %p133 = por %p131, %p132
      %p134 = scmp.ne.s32.totalorder %s123, %s126
      %p135 = scmp.eq.s32.totalorder %s24, 1
      %p136 = por %p134, %p135
      %p137 = scmp.ne.s32.totalorder %s126, %s127
      %p138 = scmp.eq.s32.totalorder %s24, 0
      %p139 = por %p137, %p138
      %p140 = scmp.ne.s32.totalorder %s126, %s127
      %p141 = scmp.eq.s32.totalorder %s25, 1
      %p142 = por %p140, %p141
      %p144 = scmp.ne.s32.totalorder %s127, %s143
      %p145 = scmp.eq.s32.totalorder %s25, 0
      %p146 = por %p144, %p145
      %p147 = scmp.le.s32.totalorder 1, %s19
      %p148 = scmp.lt.s32.totalorder %s19, 3
      %p149 = pnand %p147, %p148
      %p150 = pneg %p149
      // Predicated region
      $region9: #{tpu_custom_call.1} parent=5 // pred_check
        _
      $region10: #{tpu_custom_call.1} parent=5 // pred_check_branch
        %152 = sbr.rel (%p149) target = $region12
      $region11: #{tpu_custom_call.1} parent=5 // pred_region
        %s153 = ssub.s32 %s19, 1
      $region12: #{tpu_custom_call.1} parent=5 // pred_fallthru
        _
      %p154 = scmp.lt.s32.totalorder %s19, 2
      // Predicated region
      $region13: #{tpu_custom_call.1} parent=5 // pred_check
        %p155 = pneg %p154
      $region14: #{tpu_custom_call.1} parent=5 // pred_check_branch
        %157 = sbr.rel (%p155) target = $region16
      $region15: #{tpu_custom_call.1} parent=5 // pred_region
        // Predicated region
        $region17: #{tpu_custom_call.1} parent=15 // pred_check
          %p158 = pneg %p53
        $region18: #{tpu_custom_call.1} parent=15 // pred_check_branch
          %160 = sbr.rel (%p158) target = $region20
        $region19: #{tpu_custom_call.1} parent=15 // pred_region
          %s161 = sadd.s32 %s26, %s27
          %s162 = smul.u32 2, %s161
          %p163 = scmp.lt.s32.totalorder %s162, 3
          %s164 = scalar_select %p163, %s162, 3
          %s165 = smul.addr %s164, 8
          %s166 = scalar_lea.vmem %s0, %s165
          %s167 = sadd.s32 %s26, %s27
          %s168 = smul.u32 2, %s167
        $region20: #{tpu_custom_call.1} parent=15 // pred_fallthru
          _
        // Predicated region
        $region21: #{tpu_custom_call.1} parent=15 // pred_check
          %p169 = pneg %p81
        $region22: #{tpu_custom_call.1} parent=15 // pred_check_branch
          %171 = sbr.rel (%p169) target = $region24
        $region23: #{tpu_custom_call.1} parent=15 // pred_region
          %s172 = sand.u32 %s71, 1
          %s173 = scalar_lea.sflag [#allocation5], %s172
          %s174 = sand.u32 %s71, 1
          %s175 = smul.addr %s174, 64
          %s176 = scalar_lea.vmem [#allocation4], %s175
          %s177 = sadd.s32 %s26, %s27
          %s178 = smul.u32 2, %s177
          %s180 = ssub.s32 1024, 1024
          %181 = vsyncadd %s173, %s180
          %s182 = smul.addr %s178, 4
          %s183 = smul.addr %s182, 128
          %s184 = scalar_lea.hbm %s1, %s183
          %s185 = sshll.u32 %s176, 4
          %s186 = int_to_ptr.vmem [resolvable:$true] %s185
          %191 = dma.hbm_to_vmem [thread:$0]  %s184, 1024, %s186, %s173, 512, 512, 32
        $region24: #{tpu_custom_call.1} parent=15 // pred_fallthru
          _
      $region16: #{tpu_custom_call.1} parent=5 // pred_fallthru
        _
      %p192 = scmp.le.s32.totalorder 1, %s19
      %p193 = scmp.lt.s32.totalorder %s19, 3
      %p194 = pnand %p192, %p193
      %p195 = pneg %p194
      // Predicated region
      $region25: #{tpu_custom_call.1} parent=5 // pred_check
        _
      $region26: #{tpu_custom_call.1} parent=5 // pred_check_branch
        %197 = sbr.rel (%p194) target = $region28
      $region27: #{tpu_custom_call.1} parent=5 // pred_region
        %s198 = ssub.s32 %s19, 1
        %s199 = sand.u32 %s74, 1
        %s200 = scalar_lea.sflag [#allocation5], %s199
        %s201 = sand.u32 %s74, 1
        %s202 = smul.addr %s201, 64
        %s203 = scalar_lea.vmem [#allocation4], %s202
        // Predicated region
        $region29: #{tpu_custom_call.1} parent=27 // pred_check
          %p204 = pneg %p87
        $region30: #{tpu_custom_call.1} parent=27 // pred_check_branch
          %206 = sbr.rel (%p204) target = $region32
        $region31: #{tpu_custom_call.1} parent=27 // pred_region
          %207 = dma.done %s200, 1024
        $region32: #{tpu_custom_call.1} parent=27 // pred_fallthru
          _
        %s208 = sadd.s32 %s28, %s29
        %s209 = smul.u32 2, %s208
        %p210 = scmp.lt.s32.totalorder %s209, 3
        %s211 = scalar_select %p210, %s209, 3
        %s212 = smul.addr %s211, 8
        %s213 = scalar_lea.vmem %s0, %s212
        %p214 = pneg %p59
        %p215 = pneg %p56
        %s216 = sand.u32 %s74, 1
        %s217 = scalar_lea.sflag [#allocation5], %s216
        %s218 = sand.u32 %s74, 1
        %s219 = smul.addr %s218, 64
        %s220 = scalar_lea.vmem [#allocation4], %s219
        %p221 = pneg %p87
        %p222 = pneg %p84
        %p223 = pneg %p113
        %p224 = pneg %p110
        %s225 = sand.u32 %s100, 1
        %s226 = scalar_lea.sflag [#allocation6], %s225
        %s227 = sand.u32 %s100, 1
        %s228 = smul.addr %s227, 8
        %s229 = scalar_lea.vmem [#allocation7], %s228
        %p230 = pneg %p139
        %p231 = pneg %p136
        %s232 = sand.u32 %s126, 1
        %s233 = scalar_lea.sflag [#allocation9], %s232
        %s234 = sand.u32 %s126, 1
        %s235 = smul.addr %s234, 8
        %s236 = scalar_lea.vmem [#allocation8], %s235
        %s237 = sadd.s32 %s28, %s29
        %s238 = smul.u32 2, %s237
        %p239 = scmp.lt.s32.totalorder %s238, 3
        %s240 = scalar_select %p239, %s238, 3
        %s241 = smul.addr %s240, 8
        %s242 = scalar_lea.vmem %s0, %s241
        %s243 = sadd.s32 %s28, %s29
        %s244 = smul.u32 2, %s243
        %s245 = sadd.s32 %s28, %s29
        %s246 = smul.u32 2, %s245
        %p247 = scmp.eq.s32.totalorder %s29, 0
        // Predicated region
        $region33: #{tpu_custom_call.1} parent=27 // pred_check
          %p248 = pneg %p247
        $region34: #{tpu_custom_call.1} parent=27 // pred_check_branch
          %250 = sbr.rel (%p248) target = $region36
        $region35: #{tpu_custom_call.1} parent=27 // pred_region
          %vm251 = vcmask 7168
          %252 = vst.msk [vmem:[#allocation2] sm:$0xff] %vm251, 0.0
          %253 = vst.msk [vmem:[#allocation2 + $0x8] sm:$0xff] %vm251, 0.0
          %254 = vst.msk [vmem:[#allocation3] sm:$0xff] %vm251, 0.0
          %255 = vst.msk [vmem:[#allocation3 + $0x8] sm:$0xff] %vm251, 0.0
        $region36: #{tpu_custom_call.1} parent=27 // pred_fallthru
          _
        %v256 = vld [vmem:[%s203] sm:$0xff]
        %v257 = vld [vmem:[%s203 + $0x8] sm:$0xff]
        %v258 = vld [vmem:[%s203 + $0x10] sm:$0xff]
        %v259 = vld [vmem:[%s203 + $0x18] sm:$0xff]
        %v260 = vld [vmem:[%s203 + $0x20] sm:$0xff]
        %v261 = vld [vmem:[%s203 + $0x28] sm:$0xff]
        %v262 = vld [vmem:[%s203 + $0x30] sm:$0xff]
        %v263 = vld [vmem:[%s203 + $0x38] sm:$0xff]
        %v264 = vld [vmem:[%s242] sm:$0xff]
        %v265 = vld [vmem:[%s242 + $0x8] sm:$0xff]
        %v266 = vmax.f32 %v256, %v258
        %v267 = vmax.f32 %v257, %v259
        %v268 = vmax.f32 %v266, %v267
        %269 = vmax.xlane.f32.xlu0 %v268
        %v270 = vpop.xlane.xlu0 %269
        %v271 = vmax.f32 %v260, %v262
        %v272 = vmax.f32 %v261, %v263
        %v273 = vmax.f32 %v271, %v272
        %274 = vmax.xlane.f32.xlu0 %v273
        %v275 = vpop.xlane.xlu0 %274
        %v276 = vsub.f32 %v256, %v270
        %v277 = vsub.f32 %v257, %v270
        %v278 = vsub.f32 %v258, %v270
        %v279 = vsub.f32 %v259, %v270
        %v280 = vsub.f32 %v260, %v275
        %v281 = vsub.f32 %v261, %v275
        %v282 = vsub.f32 %v262, %v275
        %v283 = vsub.f32 %v263, %v275
        %v284 = vmul.f32 %v276, 1.442695
        %v285 = vpow.pop %v284
        %v286 = vmul.f32 %v277, 1.442695
        %v287 = vpow.pop %v286
        %v288 = vmul.f32 %v278, 1.442695
        %v289 = vpow.pop %v288
        %v290 = vmul.f32 %v279, 1.442695
        %v291 = vpow.pop %v290
        %v292 = vmul.f32 %v280, 1.442695
        %v293 = vpow.pop %v292
        %v294 = vmul.f32 %v281, 1.442695
        %v295 = vpow.pop %v294
        %v296 = vmul.f32 %v282, 1.442695
        %v297 = vpow.pop %v296
        %v298 = vmul.f32 %v283, 1.442695
        %v299 = vpow.pop %v298
        %v300 = vadd.f32 %v285, %v287
        %v301 = vadd.f32 %v300, %v289
        %v302 = vadd.f32 %v301, %v291
        %303 = vadd.xlane.f32.xlu0 %v302
        %v304 = vpop.xlane.xlu0 %303
        %v305 = vadd.f32 %v293, %v295
        %v306 = vadd.f32 %v305, %v297
        %v307 = vadd.f32 %v306, %v299
        %308 = vadd.xlane.f32.xlu0 %v307
        %v309 = vpop.xlane.xlu0 %308
        %v310 = vlog2.pop %v304
        %v311 = vmul.f32 %v310, 0.6931472
        %v312 = vlog2.pop %v309
        %v313 = vmul.f32 %v312, 0.6931472
        %v314 = vadd.f32 %v311, %v270
        %v315 = vadd.f32 %v313, %v275
        %v316 = vlaneseq
        %v317 = vand.u32 %v316, 127
        %v318 = vadd.s32 %v317, 128
        %v319 = vadd.s32 %v317, 256
        %v320 = vadd.s32 %v317, 384
        %321 = vset.pattern.permute.xlu0 0
        %322 = vperm.xlu0 %321, %v264
        %v323 = vpop.permute.xlu0 %322
        %324 = vset.pattern.permute.xlu0 0
        %325 = vperm.xlu0 %324, %v265
        %v326 = vpop.permute.xlu0 %325
        %vm327 = vcmp.eq.s32.totalorder %v317, %v323
        %vm328 = vcmp.eq.s32.totalorder %v318, %v323
        %vm329 = vcmp.eq.s32.totalorder %v319, %v323
        %vm330 = vcmp.eq.s32.totalorder %v320, %v323
        %vm331 = vcmp.eq.s32.totalorder %v317, %v326
        %vm332 = vcmp.eq.s32.totalorder %v318, %v326
        %vm333 = vcmp.eq.s32.totalorder %v319, %v326
        %vm334 = vcmp.eq.s32.totalorder %v320, %v326
        %v335 = vsel %vm327, %v256, 0.0
        %v336 = vsel %vm328, %v257, 0.0
        %v337 = vsel %vm329, %v258, 0.0
        %v338 = vsel %vm330, %v259, 0.0
        %v339 = vsel %vm331, %v260, 0.0
        %v340 = vsel %vm332, %v261, 0.0
        %v341 = vsel %vm333, %v262, 0.0
        %v342 = vsel %vm334, %v263, 0.0
        %v343 = vadd.f32 %v335, %v336
        %v344 = vadd.f32 %v343, %v337
        %v345 = vadd.f32 %v344, %v338
        %346 = vadd.xlane.f32.xlu0 %v345
        %v347 = vpop.xlane.xlu0 %346
        %v348 = vadd.f32 %v339, %v340
        %v349 = vadd.f32 %v348, %v341
        %v350 = vadd.f32 %v349, %v342
        %351 = vadd.xlane.f32.xlu0 %v350
        %v352 = vpop.xlane.xlu0 %351
        %v353 = vadd.f32 %v256, %v257
        %v354 = vadd.f32 %v353, %v258
        %v355 = vadd.f32 %v354, %v259
        %356 = vadd.xlane.f32.xlu0 %v355
        %v357 = vpop.xlane.xlu0 %356
        %v358 = vadd.f32 %v260, %v261
        %v359 = vadd.f32 %v358, %v262
        %v360 = vadd.f32 %v359, %v263
        %361 = vadd.xlane.f32.xlu0 %v360
        %v362 = vpop.xlane.xlu0 %361
        %v363 = vsub.f32 %v314, %v347
        %v364 = vsub.f32 %v315, %v352
        %v365 = vmul.f32 %v314, 512.0
        %v366 = vmul.f32 %v315, 512.0
        %v367 = vsub.f32 %v365, %v357
        %v368 = vsub.f32 %v366, %v362
        %v369 = vlaneseq
        %v370 = vshrl.u32 %v369, 7
        %v371 = vadd.s32 %v370, 8
        %s372 = sadd.s32 %s28, %s29
        %s373 = smul.u32 %s372, 16
        %v374 = vstv %s373
        %v375 = vadd.s32 %v374, %v370
        %v376 = vadd.s32 %v374, %v371
        %vm377 = vcmp.lt.s32.totalorder %v375, 16
        %vm378 = vcmp.lt.s32.totalorder %v376, 16
        %vm379 = vcmp.ne.s32.totalorder %v264, 3
        %vm380 = vcmp.ne.s32.totalorder %v265, 3
        %vm381 = vmand %vm377, %vm379
        %vm382 = vmand %vm378, %vm380
        %v383 = vsel %vm381, %v363, 0.0
        %v384 = vsel %vm382, %v364, 0.0
        %v385 = vsel %vm381, %v367, 0.0
        %v386 = vsel %vm382, %v368, 0.0
        %v387 = vld [vmem:[#allocation2] sm:$0xff]
        %v388 = vld [vmem:[#allocation2 + $0x8] sm:$0xff]
        %v389 = vadd.f32 %v387, %v383
        %v390 = vadd.f32 %v388, %v384
        %vm391 = vcmask 7168
        %392 = vst.msk [vmem:[#allocation2] sm:$0xff] %vm391, %v389
        %393 = vst.msk [vmem:[#allocation2 + $0x8] sm:$0xff] %vm391, %v390
        %v394 = vld [vmem:[#allocation3] sm:$0xff]
        %v395 = vld [vmem:[#allocation3 + $0x8] sm:$0xff]
        %v396 = vadd.f32 %v394, %v385
        %v397 = vadd.f32 %v395, %v386
        %398 = vst.msk [vmem:[#allocation3] sm:$0xff] %vm391, %v396
        %399 = vst.msk [vmem:[#allocation3 + $0x8] sm:$0xff] %vm391, %v397
        // Predicated region
        $region37: #{tpu_custom_call.1} parent=27 // pred_check
          %p400 = pneg %p247
        $region38: #{tpu_custom_call.1} parent=27 // pred_check_branch
          %402 = sbr.rel (%p400) target = $region40
        $region39: #{tpu_custom_call.1} parent=27 // pred_region
          %v403 = vld [vmem:[#allocation2] sm:$0xff]
          %v404 = vld [vmem:[#allocation2 + $0x8] sm:$0xff]
          %v405 = vsel %vm391, %v403, 0.0
          %v406 = vsel %vm391, %v404, 0.0
          %v407 = vadd.f32 %v405, %v406
          %v408 = vrot.slane %v407, 4
          %v409 = vadd.f32 %v407, %v408
          %v410 = vrot.slane %v409, 2
          %v411 = vadd.f32 %v409, %v410
          %v412 = vrot.slane %v411, 1
          %v413 = vadd.f32 %v411, %v412
          %v414 = vld [vmem:[#allocation3] sm:$0xff]
          %v415 = vld [vmem:[#allocation3 + $0x8] sm:$0xff]
          %v416 = vsel %vm391, %v414, 0.0
          %v417 = vsel %vm391, %v415, 0.0
          %v418 = vadd.f32 %v416, %v417
          %v419 = vrot.slane %v418, 4
          %v420 = vadd.f32 %v418, %v419
          %v421 = vrot.slane %v420, 2
          %v422 = vadd.f32 %v420, %v421
          %v423 = vrot.slane %v422, 1
          %v424 = vadd.f32 %v422, %v423
          %426 = vset.pattern.permute.xlu0 0
          %427 = vperm.xlu0 %426, %v413
          %v428 = vpop.permute.xlu0 %427
          %430 = vst [vmem:[%s229] sm:$0xff] %v428
          %432 = vset.pattern.permute.xlu0 0
          %433 = vperm.xlu0 %432, %v424
          %v434 = vpop.permute.xlu0 %433
          %436 = vst [vmem:[%s236] sm:$0xff] %v434
        $region40: #{tpu_custom_call.1} parent=27 // pred_fallthru
          _
        %s437 = sand.u32 %s100, 1
        %s438 = scalar_lea.sflag [#allocation6], %s437
        %s439 = sand.u32 %s100, 1
        %s440 = smul.addr %s439, 8
        %s441 = scalar_lea.vmem [#allocation7], %s440
        %s442 = sand.u32 %s126, 1
        %s443 = scalar_lea.sflag [#allocation9], %s442
        %s444 = sand.u32 %s126, 1
        %s445 = smul.addr %s444, 8
        %s446 = scalar_lea.vmem [#allocation8], %s445
        // Predicated region
        $region41: #{tpu_custom_call.1} parent=27 // pred_check
          %p447 = pneg %p110
        $region42: #{tpu_custom_call.1} parent=27 // pred_check_branch
          %449 = sbr.rel (%p447) target = $region44
        $region43: #{tpu_custom_call.1} parent=27 // pred_region
          %s451 = ssub.s32 128, 128
          %452 = vsyncadd %s438, %s451
          %s453 = smul.addr %s28, 128
          %s454 = scalar_lea.hbm %s2, %s453
          %s456 = sshll.u32 %s441, 4
          %s457 = int_to_ptr.vmem [resolvable:$true] %s456
          %459 = dma.vmem_to_hbm [thread:$0]  %s457, 128, %s454, %s438
        $region44: #{tpu_custom_call.1} parent=27 // pred_fallthru
          _
        // Predicated region
        $region45: #{tpu_custom_call.1} parent=27 // pred_check
          %p460 = pneg %p136
        $region46: #{tpu_custom_call.1} parent=27 // pred_check_branch
          %462 = sbr.rel (%p460) target = $region48
        $region47: #{tpu_custom_call.1} parent=27 // pred_region
          %s464 = ssub.s32 128, 128
          %465 = vsyncadd %s443, %s464
          %s466 = smul.addr %s28, 128
          %s467 = scalar_lea.hbm %s3, %s466
          %s469 = sshll.u32 %s446, 4
          %s470 = int_to_ptr.vmem [resolvable:$true] %s469
          %472 = dma.vmem_to_hbm [thread:$0]  %s470, 128, %s467, %s443
        $region48: #{tpu_custom_call.1} parent=27 // pred_fallthru
          _
      $region28: #{tpu_custom_call.1} parent=5 // pred_fallthru
        _
      %p473 = scmp.le.s32.totalorder 2, %s19
      // Predicated region
      $region49: #{tpu_custom_call.1} parent=5 // pred_check
        %p474 = pneg %p473
      $region50: #{tpu_custom_call.1} parent=5 // pred_check_branch
        %476 = sbr.rel (%p474) target = $region52
      $region51: #{tpu_custom_call.1} parent=5 // pred_region
        %s477 = ssub.s32 %s19, 2
        // Predicated region
        $region53: #{tpu_custom_call.1} parent=51 // pred_check
          %p478 = pneg %p116
        $region54: #{tpu_custom_call.1} parent=51 // pred_check_branch
          %480 = sbr.rel (%p478) target = $region56
        $region55: #{tpu_custom_call.1} parent=51 // pred_region
          %s481 = sand.u32 %s101, 1
          %s482 = scalar_lea.sflag [#allocation6], %s481
          %s483 = sand.u32 %s101, 1
          %s484 = smul.addr %s483, 8
          %s485 = scalar_lea.vmem [#allocation7], %s484
          %486 = dma.done %s482, 128
        $region56: #{tpu_custom_call.1} parent=51 // pred_fallthru
          _
        // Predicated region
        $region57: #{tpu_custom_call.1} parent=51 // pred_check
          %p487 = pneg %p142
        $region58: #{tpu_custom_call.1} parent=51 // pred_check_branch
          %489 = sbr.rel (%p487) target = $region60
        $region59: #{tpu_custom_call.1} parent=51 // pred_region
          %s490 = sand.u32 %s127, 1
          %s491 = scalar_lea.sflag [#allocation9], %s490
          %s492 = sand.u32 %s127, 1
          %s493 = smul.addr %s492, 8
          %s494 = scalar_lea.vmem [#allocation8], %s493
          %495 = dma.done %s491, 128
        $region60: #{tpu_custom_call.1} parent=51 // pred_fallthru
          _
      $region52: #{tpu_custom_call.1} parent=5 // pred_fallthru
        _
    $region6: #{tpu_custom_call.1} parent=1 // loop_footer
      %s23 = sadd.s32 1, %s19
    $region7: #{tpu_custom_call.1} parent=1 // loop_footer_branch
      %18 = sbr.rel target = $region3
    $region8: #{tpu_custom_call.1} parent=1 // loop_exit
      _
    %496 = vsyncpa [#allocation5], 1
    %s497 = scalar_lea.sflag [#allocation5], 1
    %498 = vsyncpa %s497, 1
    %499 = vsyncpa [#allocation6], 1
    %s500 = scalar_lea.sflag [#allocation6], 1
    %501 = vsyncpa %s500, 1
    %502 = vsyncpa [#allocation9], 1
    %s503 = scalar_lea.sflag [#allocation9], 1
    %504 = vsyncpa %s503, 1

</llo_original>
